<compile_context>
chip_gen: v5e
topology: v5e:2x2
jax: 0.10.0
libtpu: 0.0.40
codegen_flags: <defaults>
</compile_context>

<pallas_src>
import jax
import jax.numpy as jnp
from jax.experimental import pallas as pl
from jax.experimental.pallas import tpu as pltpu

_SMOOTH = 1.0


def _sublane_multiple(*dtypes):
    """Dtype-aware sublane packing: 8 rows (4B), 16 (2B), 32 (1B)."""
    m = 8
    for dt in dtypes:
        itemsize = jnp.dtype(dt).itemsize
        if itemsize in (1, 2, 4):
            m = max(m, 8 * (4 // itemsize))
    return m


def _largest_divisor_leq(n, limit):
    limit = max(1, min(n, limit))
    for d in range(limit, 0, -1):
        if n % d == 0:
            return d
    return 1


def _tpu_vmem_bytes():
    try:
        return int(pltpu.get_tpu_info().vmem_capacity_bytes)
    except Exception:
        return 64 << 20  # conservative (v7x-sized) fallback


def _dice_partial_kernel(p_ref, t_ref, pt_ref, s_ref):
    """One grid step: reduce this tile to a small per-step partial.

    p_ref, t_ref : VMEM channel-0 tiles in their native dtype,
                   shape (tb, R, W) [flat path] or (tb, tg, S, W) [grouped].
    pt_ref       : VMEM f32 partial sum of p*t over the leading dims.
    s_ref        : VMEM f32 partial sum of p+t over the leading dims.
    """
    p = p_ref[...].astype(jnp.float32)
    t = t_ref[...].astype(jnp.float32)
    pt = p * t
    s = p + t
    # Leading-dim reductions: pure VALU vreg adds (sublane/lane layout kept).
    for _ in range(p.ndim - 2):
        pt = pt.sum(axis=0)
        s = s.sum(axis=0)
    pt_ref[...] = pt
    s_ref[...] = s


def dice_loss(y_pred, y_true, *, target_tile_elems=None):
    """Matches DiceLoss.forward: uses only channel 0 of the NC... inputs."""
    assert y_pred.shape == y_true.shape
    assert y_pred.ndim >= 2
    b, c = int(y_pred.shape[0]), int(y_pred.shape[1])
    spatial = tuple(int(d) for d in y_pred.shape[2:])
    plane = 1
    for d in spatial:
        plane *= d
    plane = max(plane, 1)

    # Generation-aware budgets (v7x has 64 MiB VMEM; v5e/v6e have 128 MiB).
    vmem_phys = _tpu_vmem_bytes()
    small_vmem = vmem_phys < (100 << 20)
    if target_tile_elems is None:
        target_tile_elems = (512 << 10) if small_vmem else (1 << 20)
    vmem_soft_cap = (44 << 20) if small_vmem else (96 << 20)
    vmem_hard_cap = max(vmem_soft_cap, vmem_phys - (8 << 20))

    # Lane-dense view of the channel plane when possible (last dim == 128).
    if plane % 128 == 0:
        rows, width = plane // 128, 128
    elif len(spatial) >= 2:
        width = spatial[-1]
        rows = plane // width
    else:
        rows, width = 1, plane

    sub = _sublane_multiple(y_pred.dtype, y_true.dtype)
    while sub > 8 and rows % sub != 0:
        sub //= 2
    grouped = (rows % sub == 0)

    itemsize_sum = y_pred.dtype.itemsize + y_true.dtype.itemsize

    if grouped:
        # (b, c, G, S, W): blocks are (tb, 1, tg, S, W); last two dims are
        # sublane/lane aligned by construction.
        G = rows // sub
        p_in = y_pred.reshape(b, c, G, sub, width)
        t_in = y_true.reshape(b, c, G, sub, width)
        group_elems = sub * width
        plane_elems = G * group_elems
        if plane_elems <= target_tile_elems:
            tg = G
            tb = _largest_divisor_leq(b, max(1, target_tile_elems // plane_elems))
        else:
            tb = 1
            tg = _largest_divisor_leq(G, max(1, target_tile_elems // group_elems))
        nb, ng = b // tb, G // tg
        grid = (nb, ng)
        tile_elems = tb * tg * group_elems
        out_elems = sub * width

        in_block = (tb, None, tg, sub, width)
        in_idx = lambda bi, gi: (bi, 0, gi, 0, 0)   # channel block 0 -> ch 0
        out_block = (None, None, sub, width)
        out_idx = lambda bi, gi: (bi, gi, 0, 0)
        out_sds = jax.ShapeDtypeStruct((nb, ng, sub, width), jnp.float32)
        semantics = ("parallel", "parallel")
    else:
        # Generic fallback: full (rows, width) extent per block (always legal),
        # tile only over batch.
        p_in = y_pred.reshape(b, c, rows, width)
        t_in = y_true.reshape(b, c, rows, width)
        plane_elems = rows * width
        tb = _largest_divisor_leq(b, max(1, target_tile_elems // plane_elems))
        nb = b // tb
        grid = (nb,)
        tile_elems = tb * plane_elems
        out_elems = rows * width

        in_block = (tb, None, rows, width)
        in_idx = lambda bi: (bi, 0, 0, 0)
        out_block = (None, rows, width)
        out_idx = lambda bi: (bi, 0, 0)
        out_sds = jax.ShapeDtypeStruct((nb, rows, width), jnp.float32)
        semantics = ("parallel",)

    # Scoped-VMEM budget: double-buffered inputs + double-buffered tiny outputs.
    needed = 2 * tile_elems * itemsize_sum + 2 * 2 * out_elems * 4
    vmem_limit = min(max(needed + (8 << 20), 32 << 20), vmem_soft_cap)
    if needed + (4 << 20) > vmem_limit:       # oversized fallback-path plane
        vmem_limit = min(needed + (4 << 20), vmem_hard_cap)
    vmem_limit = int(vmem_limit)

    partial_pt, partial_s = pl.pallas_call(
        _dice_partial_kernel,
        out_shape=(out_sds, out_sds),
        grid_spec=pltpu.PrefetchScalarGridSpec(
            num_scalar_prefetch=0,
            grid=grid,
            in_specs=[
                pl.BlockSpec(in_block, in_idx),
                pl.BlockSpec(in_block, in_idx),
            ],
            out_specs=[
                pl.BlockSpec(out_block, out_idx),
                pl.BlockSpec(out_block, out_idx),
            ],
        ),
        compiler_params=pltpu.CompilerParams(
            dimension_semantics=semantics,
            vmem_limit_bytes=vmem_limit,
        ),
    )(p_in, t_in)

    # Tiny final combine in plain JAX (partials are at most a few KB).
    inter = jnp.sum(partial_pt)
    sums = jnp.sum(partial_s)
    dsc = (2.0 * inter + _SMOOTH) / (sums + _SMOOTH)
    return 1.0 - dsc


if __name__ == "__main__":
    key = jax.random.PRNGKey(0)
    k1, k2, k3, k4, k5, k6 = jax.random.split(key, 6)

    def reference(yp, yt):
        p = yp[:, 0].astype(jnp.float32).reshape(-1)
        t = yt[:, 0].astype(jnp.float32).reshape(-1)
        inter = jnp.sum(p * t)
        return 1.0 - (2.0 * inter + _SMOOTH) / (jnp.sum(p) + jnp.sum(t) + _SMOOTH)

    # Test 1: the module's canonical small shape (2, 4, 16, 16), f32
    # -> lane-dense flat path (plane=256 -> rows=2, width=128), single step.
    yp1 = jax.nn.sigmoid(jax.random.normal(k1, (2, 4, 16, 16), jnp.float32))
    yt1 = (jax.random.uniform(k2, (2, 4, 16, 16)) > 0.5).astype(jnp.float32)
    l1 = jax.block_until_ready(dice_loss(yp1, yt1))
    r1 = reference(yp1, yt1)
    assert jnp.allclose(l1, r1, atol=1e-5, rtol=1e-5), (l1, r1)

    # Test 2: grouped lane-dense path with dtype-aware 16-row sublane groups
    # (bf16 predictions), multi-step grid over (batch, group) — both parallel.
    yp2 = jax.nn.sigmoid(
        jax.random.normal(k3, (4, 3, 32, 256), jnp.float32)).astype(jnp.bfloat16)
    yt2 = (jax.random.uniform(k4, (4, 3, 32, 256)) > 0.5).astype(jnp.float32)
    l2 = jax.block_until_ready(dice_loss(yp2, yt2, target_tile_elems=4096))
    r2 = reference(yp2, yt2)
    assert jnp.allclose(l2, r2, atol=1e-4, rtol=1e-4), (l2, r2)

    # Test 3: awkward 1-D spatial extent (100, not a multiple of 128)
    # -> generic full-extent fallback path.
    yp3 = jax.nn.sigmoid(jax.random.normal(k5, (2, 4, 100), jnp.float32))
    yt3 = (jax.random.uniform(k6, (2, 4, 100)) > 0.5).astype(jnp.float32)
    l3 = jax.block_until_ready(dice_loss(yp3, yt3))
    r3 = reference(yp3, yt3)
    assert jnp.allclose(l3, r3, atol=1e-5, rtol=1e-5), (l3, r3)

    print("KERNEL_OK")
</pallas_src>

<mosaic_0001>
module attributes {stable_mosaic.version = 11 : i64} {
  func.func @_dice_partial_kernel(%arg0: i32, %arg1: memref<2x1x2x128xf32, #tpu.memory_space<vmem>>, %arg2: memref<2x1x2x128xf32, #tpu.memory_space<vmem>>, %arg3: memref<1x2x128xf32, #tpu.memory_space<vmem>>, %arg4: memref<1x2x128xf32, #tpu.memory_space<vmem>>) attributes {dimension_semantics = [#tpu.dimension_semantics<parallel>], iteration_bounds = array<i64: 1>, scalar_prefetch = 0 : i64, scratch_operands = 0 : i64, tpu.core_type = #tpu.core_type<tc>, window_params = [{transform_indices = @transform_0, window_bounds = array<i64: 2, 1, 2, 128>}, {transform_indices = @transform_1, window_bounds = array<i64: 2, 1, 2, 128>}, {transform_indices = @transform_2, window_bounds = array<i64: 1, 2, 128>}, {transform_indices = @transform_3, window_bounds = array<i64: 1, 2, 128>}]} {
    %c0 = arith.constant 0 : index
    %c0_0 = arith.constant 0 : index
    %c0_1 = arith.constant 0 : index
    %c0_2 = arith.constant 0 : index
    %0 = vector.load %arg1[%c0, %c0_0, %c0_1, %c0_2] : memref<2x1x2x128xf32, #tpu.memory_space<vmem>>, vector<2x1x2x128xf32>
    %1 = vector.shape_cast %0 : vector<2x1x2x128xf32> to vector<2x2x128xf32>
    %c0_3 = arith.constant 0 : index
    %c0_4 = arith.constant 0 : index
    %c0_5 = arith.constant 0 : index
    %c0_6 = arith.constant 0 : index
    %2 = vector.load %arg2[%c0_3, %c0_4, %c0_5, %c0_6] : memref<2x1x2x128xf32, #tpu.memory_space<vmem>>, vector<2x1x2x128xf32>
    %3 = vector.shape_cast %2 : vector<2x1x2x128xf32> to vector<2x2x128xf32>
    %4 = arith.mulf %1, %3 : vector<2x2x128xf32>
    %5 = arith.addf %1, %3 : vector<2x2x128xf32>
    %cst = arith.constant dense<0.000000e+00> : vector<2x128xf32>
    %6 = vector.multi_reduction <add>, %4, %cst [0] : vector<2x2x128xf32> to vector<2x128xf32>
    %cst_7 = arith.constant dense<0.000000e+00> : vector<2x128xf32>
    %7 = vector.multi_reduction <add>, %5, %cst_7 [0] : vector<2x2x128xf32> to vector<2x128xf32>
    %c0_8 = arith.constant 0 : index
    %c0_9 = arith.constant 0 : index
    %c0_10 = arith.constant 0 : index
    %8 = vector.load %arg3[%c0_8, %c0_9, %c0_10] : memref<1x2x128xf32, #tpu.memory_space<vmem>>, vector<1x2x128xf32>
    %9 = vector.shape_cast %8 : vector<1x2x128xf32> to vector<2x128xf32>
    %10 = vector.shape_cast %6 : vector<2x128xf32> to vector<1x2x128xf32>
    tpu.vector_store %arg3[%c0_8, %c0_9, %c0_10], %10 {strides = array<i32>} : memref<1x2x128xf32, #tpu.memory_space<vmem>>, vector<1x2x128xf32>,
    %c0_11 = arith.constant 0 : index
    %c0_12 = arith.constant 0 : index
    %c0_13 = arith.constant 0 : index
    %11 = vector.load %arg4[%c0_11, %c0_12, %c0_13] : memref<1x2x128xf32, #tpu.memory_space<vmem>>, vector<1x2x128xf32>
    %12 = vector.shape_cast %11 : vector<1x2x128xf32> to vector<2x128xf32>
    %13 = vector.shape_cast %7 : vector<2x128xf32> to vector<1x2x128xf32>
    tpu.vector_store %arg4[%c0_11, %c0_12, %c0_13], %13 {strides = array<i32>} : memref<1x2x128xf32, #tpu.memory_space<vmem>>, vector<1x2x128xf32>,
    return
  }
  func.func @transform_0(%arg0: i32) -> (i32, i32, i32, i32) {
    %c0_i32 = arith.constant 0 : i32
    %c0_i32_0 = arith.constant 0 : i32
    %c0_i32_1 = arith.constant 0 : i32
    %c0_i32_2 = arith.constant 0 : i32
    return %arg0, %c0_i32, %c0_i32_0, %c0_i32_1 : i32, i32, i32, i32
  }
  func.func @transform_1(%arg0: i32) -> (i32, i32, i32, i32) {
    %c0_i32 = arith.constant 0 : i32
    %c0_i32_0 = arith.constant 0 : i32
    %c0_i32_1 = arith.constant 0 : i32
    %c0_i32_2 = arith.constant 0 : i32
    return %arg0, %c0_i32, %c0_i32_0, %c0_i32_1 : i32, i32, i32, i32
  }
  func.func @transform_2(%arg0: i32) -> (i32, i32, i32) {
    %c0_i32 = arith.constant 0 : i32
    %c0_i32_0 = arith.constant 0 : i32
    %c0_i32_1 = arith.constant 0 : i32
    return %arg0, %c0_i32, %c0_i32_0 : i32, i32, i32
  }
  func.func @transform_3(%arg0: i32) -> (i32, i32, i32) {
    %c0_i32 = arith.constant 0 : i32
    %c0_i32_0 = arith.constant 0 : i32
    %c0_i32_1 = arith.constant 0 : i32
    return %arg0, %c0_i32, %c0_i32_0 : i32, i32, i32
  }
}

</mosaic_0001>

<llo_original>
// kernel: tpu_custom_call.1
$region0: #{tpu_custom_call.1}
  #allocation0 [shape = 'u32[]', space=smem, size = 0x4, offset = 0x4, fixed_abs, tag = 'smem constant byte address 0x4 - core index']
  #allocation1 [shape = 'u32[72,128]{1,0:T(1,128)}', space=vmem, size = 0x9000, scoped, tag = 'internal scratch']
  %s0 = inlined_call_operand.hbm [shape: f32[2,4,2,128], index: 0, kind: input, shape index: {}]
  %s1 = inlined_call_operand.hbm [shape: f32[2,4,2,128], index: 1, kind: input, shape index: {}]
  %s2 = inlined_call_operand.hbm [shape: f32[1,2,128], index: 2, kind: output, shape index: {0}]
  %s3 = inlined_call_operand.hbm [shape: f32[1,2,128], index: 3, kind: output, shape index: {1}]
  %4 = xla_tuple %s2, %s3
  %s5 = sld [smem:[#allocation0]]
  $region34: #{tpu_custom_call.1} parent=0
    _
  %s7 = ssub.s32 1, %s5
  %s8 = scalar_select 0, %s7, %s5
  $region1: #{tpu_custom_call.1} parent=0
    #allocation2 [shape = 'u8[2048]{0}', space=vmem, size = 0x800, scoped, tag = 'input window, operand 0, single buffered']
    #allocation3 [shape = 's32[1]{0}', space=sflag, size = 0x4, scoped, tag = 'scoped memory for tpu_custom_call.1']
    #allocation4 [shape = 's32[1]{0}', space=sflag, size = 0x4, scoped, tag = 'scoped memory for tpu_custom_call.1']
    #allocation5 [shape = 'u8[2048]{0}', space=vmem, size = 0x800, scoped, tag = 'input window, operand 1, single buffered']
    #allocation6 [shape = 's32[1]{0}', space=sflag, size = 0x4, scoped, tag = 'scoped memory for tpu_custom_call.1']
    #allocation7 [shape = 'u8[1024]{0}', space=vmem, size = 0x400, scoped, tag = 'output window, operand 0, single buffered']
    #allocation8 [shape = 'u8[1024]{0}', space=vmem, size = 0x400, scoped, tag = 'output window, operand 1, single buffered']
    #allocation9 [shape = 's32[1]{0}', space=sflag, size = 0x4, scoped, tag = 'scoped memory for tpu_custom_call.1']
    %9 = vsyncpa [#allocation3], 0
    %10 = vsyncpa [#allocation6], 0
    %11 = vsyncpa [#allocation4], 0
    %12 = vsyncpa [#allocation9], 0
    // Predicated region
    $region2: #{tpu_custom_call.1} parent=1 // pred_check
      _
    $region3: #{tpu_custom_call.1} parent=1 // pred_check_branch
      %14 = sbr.rel (0) target = $region5
    $region4: #{tpu_custom_call.1} parent=1 // pred_region
      %16 = vsyncadd [#allocation3], 0
      %s17 = sshll.u32 %s0, 4
      %s18 = int_to_ptr.hbm [resolvable:$true] %s17
      %s19 = sshll.u32 [#allocation2], 4
      %s20 = int_to_ptr.vmem [resolvable:$true] %s19
      %25 = dma.hbm_to_vmem [thread:$0]  %s18, 64, %s20, [#allocation3], 128, 32, 2
    $region5: #{tpu_custom_call.1} parent=1 // pred_fallthru
      _
    // Predicated region
    $region6: #{tpu_custom_call.1} parent=1 // pred_check
      _
    $region7: #{tpu_custom_call.1} parent=1 // pred_check_branch
      %27 = sbr.rel (0) target = $region9
    $region8: #{tpu_custom_call.1} parent=1 // pred_region
      %29 = vsyncadd [#allocation6], 0
      %s30 = sshll.u32 %s1, 4
      %s31 = int_to_ptr.hbm [resolvable:$true] %s30
      %s32 = sshll.u32 [#allocation5], 4
      %s33 = int_to_ptr.vmem [resolvable:$true] %s32
      %38 = dma.hbm_to_vmem [thread:$0]  %s31, 64, %s33, [#allocation6], 128, 32, 2
    $region9: #{tpu_custom_call.1} parent=1 // pred_fallthru
      _
    // Predicated region
    $region10: #{tpu_custom_call.1} parent=1 // pred_check
      _
    $region11: #{tpu_custom_call.1} parent=1 // pred_check_branch
      %40 = sbr.rel (0) target = $region13
    $region12: #{tpu_custom_call.1} parent=1 // pred_region
      %42 = dma.done [#allocation3], 64
    $region13: #{tpu_custom_call.1} parent=1 // pred_fallthru
      _
    // Predicated region
    $region14: #{tpu_custom_call.1} parent=1 // pred_check
      _
    $region15: #{tpu_custom_call.1} parent=1 // pred_check_branch
      %44 = sbr.rel (0) target = $region17
    $region16: #{tpu_custom_call.1} parent=1 // pred_region
      %46 = dma.done [#allocation6], 64
    $region17: #{tpu_custom_call.1} parent=1 // pred_fallthru
      _
    %v47 = vld [vmem:[#allocation2] sm:$0x3]
    %v48 = vld [vmem:[#allocation2 + $0x2] sm:$0x3]
    %v49 = vld [vmem:[#allocation5] sm:$0x3]
    %v50 = vld [vmem:[#allocation5 + $0x2] sm:$0x3]
    %v51 = vmul.f32 %v47, %v49
    %v52 = vmul.f32 %v48, %v50
    %v53 = vadd.f32 %v47, %v49
    %v54 = vadd.f32 %v48, %v50
    %vm55 = vcmask 1041408
    %v56 = vsel %vm55, %v51, 0.0
    %v57 = vsel %vm55, %v52, 0.0
    %v58 = vadd.f32 %v56, %v57
    %v59 = vsel %vm55, %v53, 0.0
    %v60 = vsel %vm55, %v54, 0.0
    %v61 = vadd.f32 %v59, %v60
    %62 = vst [vmem:[#allocation7] sm:$0x3] %v58
    %63 = vst [vmem:[#allocation8] sm:$0x3] %v61
    // Predicated region
    $region18: #{tpu_custom_call.1} parent=1 // pred_check
      _
    $region19: #{tpu_custom_call.1} parent=1 // pred_check_branch
      %65 = sbr.rel (0) target = $region21
    $region20: #{tpu_custom_call.1} parent=1 // pred_region
      %67 = vsyncadd [#allocation4], 0
      %s69 = sshll.u32 [#allocation7], 4
      %s70 = int_to_ptr.vmem [resolvable:$true] %s69
      %s71 = sshll.u32 %s2, 4
      %s72 = int_to_ptr.hbm [resolvable:$true] %s71
      %74 = dma.vmem_to_hbm [thread:$0]  %s70, 32, %s72, [#allocation4]
    $region21: #{tpu_custom_call.1} parent=1 // pred_fallthru
      _
    // Predicated region
    $region22: #{tpu_custom_call.1} parent=1 // pred_check
      _
    $region23: #{tpu_custom_call.1} parent=1 // pred_check_branch
      %76 = sbr.rel (0) target = $region25
    $region24: #{tpu_custom_call.1} parent=1 // pred_region
      %78 = vsyncadd [#allocation9], 0
      %s80 = sshll.u32 [#allocation8], 4
      %s81 = int_to_ptr.vmem [resolvable:$true] %s80
      %s82 = sshll.u32 %s3, 4
      %s83 = int_to_ptr.hbm [resolvable:$true] %s82
      %85 = dma.vmem_to_hbm [thread:$0]  %s81, 32, %s83, [#allocation9]
    $region25: #{tpu_custom_call.1} parent=1 // pred_fallthru
      _
    // Predicated region
    $region26: #{tpu_custom_call.1} parent=1 // pred_check
      _
    $region27: #{tpu_custom_call.1} parent=1 // pred_check_branch
      %87 = sbr.rel (0) target = $region29
    $region28: #{tpu_custom_call.1} parent=1 // pred_region
      %89 = dma.done [#allocation4], 32
    $region29: #{tpu_custom_call.1} parent=1 // pred_fallthru
      _
    // Predicated region
    $region30: #{tpu_custom_call.1} parent=1 // pred_check
      _
    $region31: #{tpu_custom_call.1} parent=1 // pred_check_branch
      %91 = sbr.rel (0) target = $region33
    $region32: #{tpu_custom_call.1} parent=1 // pred_region
      %93 = dma.done [#allocation9], 32
    $region33: #{tpu_custom_call.1} parent=1 // pred_fallthru
      _
    %94 = vsyncpa [#allocation3], 1
    %95 = vsyncpa [#allocation6], 1
    %96 = vsyncpa [#allocation4], 1
    %97 = vsyncpa [#allocation9], 1

</llo_original>
